<compile_context>
chip_gen: v7x
topology: tpu7x:2x2x1
jax: 0.10.0
libtpu: 0.0.40
codegen_flags: <defaults>
</compile_context>

<pallas_src>
import functools

import jax
import jax.numpy as jnp
from jax.experimental import pallas as pl
from jax.experimental.pallas import tpu as pltpu

F_IN = 1344
HIDDEN = 32
BN_EPS = 1e-5
LANE = 128
SUBLANE = 8
VMEM_LIMIT = 48 * 1024 * 1024  # explicit ceiling; safe on v5e/v6e/v7x


def _round_up(x, m):
    return (x + m - 1) // m * m


# ---------------------------------------------------------------------------
# Path A: whole batch VMEM-resident, everything fused in one kernel.
# BN uses centered variance (no E[x^2]-mean^2 cancellation).
# ---------------------------------------------------------------------------
def _fused_small_kernel(x_ref, gamma_ref, beta_ref, w2t_ref, b2_ref,
                        w3t_ref, b3_ref, out_ref):
    x = x_ref[...].astype(jnp.float32)                    # (N, F)
    n = x.shape[0]
    inv_n = 1.0 / n
    mean = jnp.sum(x, axis=0, keepdims=True) * inv_n      # (1, F)
    xc = x - mean
    var = jnp.sum(xc * xc, axis=0, keepdims=True) * inv_n  # biased, centered
    scale = gamma_ref[...] * jax.lax.rsqrt(var + BN_EPS)
    y = xc * scale + beta_ref[...]                         # (N, F)
    h = jnp.dot(y, w2t_ref[...],
                preferred_element_type=jnp.float32) + b2_ref[...]   # (N, 32)
    out = jnp.dot(h, w3t_ref[...],
                  preferred_element_type=jnp.float32) + b3_ref[...]  # (N, Cp)
    out_ref[...] = out.astype(out_ref.dtype)


def _forward_fused_resident(x, gamma, beta, w2, b2, w3, b3, num_classes, c_pad):
    n = x.shape[0]
    gamma2 = gamma.astype(jnp.float32).reshape(1, F_IN)
    beta2 = beta.astype(jnp.float32).reshape(1, F_IN)
    w2t = w2.T.astype(jnp.float32)                                    # (F, 32)
    b2_2 = b2.astype(jnp.float32).reshape(1, HIDDEN)
    w3t = jnp.pad(w3.T.astype(jnp.float32),
                  ((0, 0), (0, c_pad - num_classes)))                 # (32, Cp)
    b3_2 = jnp.pad(b3.astype(jnp.float32),
                   (0, c_pad - num_classes)).reshape(1, c_pad)

    out = pl.pallas_call(
        _fused_small_kernel,
        out_shape=jax.ShapeDtypeStruct((n, c_pad), jnp.float32),
        compiler_params=pltpu.CompilerParams(vmem_limit_bytes=VMEM_LIMIT),
    )(x, gamma2, beta2, w2t, b2_2, w3t, b3_2)
    return out[:, :num_classes]


# ---------------------------------------------------------------------------
# Path B pass 1: streamed per-feature sum / sum-of-squares.
# Grid = (num_cores, blocks_per_core); leading axis "parallel" (v7x 2 TCs).
# Each core owns an (8, F) partial accumulator (sublane-grouped -> VPU only).
# Rows beyond n (ragged tail / clamped duplicate blocks) are masked to zero.
# ---------------------------------------------------------------------------
def _bn_stats_kernel(x_ref, sum_ref, sq_ref, *, n, blocks_per_core):
    p = pl.program_id(0)
    i = pl.program_id(1)

    @pl.when(i == 0)
    def _init():
        sum_ref[...] = jnp.zeros_like(sum_ref)
        sq_ref[...] = jnp.zeros_like(sq_ref)

    tile_n, feat = x_ref.shape
    row0 = (p * blocks_per_core + i) * tile_n               # unclamped row base
    rows = row0 + jax.lax.broadcasted_iota(jnp.int32, (tile_n, 1), 0)
    x = jnp.where(rows < n, x_ref[...].astype(jnp.float32), 0.0)
    xg = x.reshape(tile_n // SUBLANE, SUBLANE, feat)        # natural layout
    sum_ref[...] += jnp.sum(xg, axis=0)
    sq_ref[...] += jnp.sum(xg * xg, axis=0)


# ---------------------------------------------------------------------------
# Path B pass 2: out = x @ W_fused + b_fused (BN + fc2 + fc3 folded).
# ---------------------------------------------------------------------------
def _fused_matmul_kernel(x_ref, w_ref, b_ref, out_ref):
    acc = jnp.dot(x_ref[...], w_ref[...], preferred_element_type=jnp.float32)
    out_ref[...] = (acc + b_ref[...]).astype(out_ref.dtype)


def _forward_two_pass(x, gamma, beta, w2, b2, w3, b3, num_classes, c_pad,
                      tile_n):
    n = x.shape[0]
    tile_n = min(tile_n, _round_up(n, SUBLANE))
    tile_n = _round_up(tile_n, SUBLANE)
    n_blocks = pl.cdiv(n, tile_n)
    p_cores = 2 if n_blocks >= 2 else 1                    # v7x: one per TC
    bpc = pl.cdiv(n_blocks, p_cores)

    # ---- pass 1: per-core partial batch statistics -------------------------
    sum_parts, sq_parts = pl.pallas_call(
        functools.partial(_bn_stats_kernel, n=n, blocks_per_core=bpc),
        out_shape=(jax.ShapeDtypeStruct((p_cores * SUBLANE, F_IN), jnp.float32),
                   jax.ShapeDtypeStruct((p_cores * SUBLANE, F_IN), jnp.float32)),
        grid=(p_cores, bpc),
        in_specs=[pl.BlockSpec(
            (tile_n, F_IN),
            # clamp so ceil-divided per-core work never addresses an
            # out-of-range block; the duplicate block is fully row-masked.
            lambda p, i: (jnp.minimum(p * bpc + i, n_blocks - 1), 0))],
        out_specs=(pl.BlockSpec((SUBLANE, F_IN), lambda p, i: (p, 0)),
                   pl.BlockSpec((SUBLANE, F_IN), lambda p, i: (p, 0))),
        compiler_params=pltpu.CompilerParams(
            dimension_semantics=("parallel", "arbitrary"),
            vmem_limit_bytes=VMEM_LIMIT),
    )(x)

    # ---- tiny fold (wrapper): BN -> (scale, shift); BN∘fc2∘fc3 -> (W, b) ---
    inv_n = 1.0 / n
    mean = jnp.sum(sum_parts, axis=0, keepdims=True) * inv_n          # (1, F)
    # NOTE: E[x^2]-mean^2 can cancel for data with |mean| >> std; acceptable
    # for roughly-centered features (the resident path uses centered variance).
    var = jnp.maximum(jnp.sum(sq_parts, axis=0, keepdims=True) * inv_n
                      - mean * mean, 0.0)
    gamma2 = gamma.astype(jnp.float32).reshape(1, F_IN)
    beta2 = beta.astype(jnp.float32).reshape(1, F_IN)
    scale = gamma2 * jax.lax.rsqrt(var + BN_EPS)                      # (1, F)
    shift = beta2 - mean * scale                                      # (1, F)

    w2t = w2.T.astype(jnp.float32)                                    # (F, 32)
    w3t = jnp.pad(w3.T.astype(jnp.float32),
                  ((0, 0), (0, c_pad - num_classes)))                 # (32, Cp)
    b3_2 = jnp.pad(b3.astype(jnp.float32),
                   (0, c_pad - num_classes)).reshape(1, c_pad)
    w_fused = (scale.T * w2t) @ w3t                                   # (F, Cp)
    b_fused = ((shift @ w2t) +
               b2.astype(jnp.float32).reshape(1, HIDDEN)) @ w3t + b3_2

    # ---- pass 2: streamed fused matmul (weights VMEM-resident) -------------
    out = pl.pallas_call(
        _fused_matmul_kernel,
        out_shape=jax.ShapeDtypeStruct((n, c_pad), jnp.float32),
        grid=(n_blocks,),
        in_specs=[pl.BlockSpec((tile_n, F_IN), lambda i: (i, 0)),
                  pl.BlockSpec((F_IN, c_pad), lambda i: (0, 0)),
                  pl.BlockSpec((1, c_pad), lambda i: (0, 0))],
        out_specs=pl.BlockSpec((tile_n, c_pad), lambda i: (i, 0)),
        compiler_params=pltpu.CompilerParams(
            dimension_semantics=("parallel",),
            vmem_limit_bytes=VMEM_LIMIT),
    )(x, w_fused, b_fused)

    return out[:, :num_classes]


def fcnet_forward(x, gamma, beta, w2, b2, w3, b3, *,
                  tile_n=1024, fused_batch_limit=2048):
    """Forward pass of FCNet (train-mode BatchNorm1d -> fc2 -> fc3)."""
    n, f = x.shape
    assert f == F_IN
    num_classes = w3.shape[0]
    c_pad = _round_up(num_classes, LANE)          # lane-dense matmul output

    if n <= fused_batch_limit:
        # x (+ in-kernel temporaries) comfortably VMEM-resident on all gens.
        return _forward_fused_resident(x, gamma, beta, w2, b2, w3, b3,
                                       num_classes, c_pad)
    return _forward_two_pass(x, gamma, beta, w2, b2, w3, b3,
                             num_classes, c_pad, tile_n)


def fcnet_reference(x, gamma, beta, w2, b2, w3, b3):
    mean = jnp.mean(x, axis=0, keepdims=True)
    var = jnp.mean((x - mean) ** 2, axis=0, keepdims=True)
    y = (x - mean) * jax.lax.rsqrt(var + BN_EPS) * gamma + beta
    h = y @ w2.T + b2
    return h @ w3.T + b3


if __name__ == "__main__":
    num_classes = 10

    key = jax.random.PRNGKey(0)
    kx, kg, kb, kw2, kb2, kw3, kb3, kx2 = jax.random.split(key, 8)

    # Deterministic synthetic parameters (shapes from the module __init__).
    gamma = 1.0 + 0.1 * jax.random.normal(kg, (F_IN,), dtype=jnp.float32)
    beta = 0.1 * jax.random.normal(kb, (F_IN,), dtype=jnp.float32)
    bound2 = 1.0 / jnp.sqrt(F_IN)
    w2 = jax.random.uniform(kw2, (HIDDEN, F_IN), jnp.float32, -bound2, bound2)
    b2 = jax.random.uniform(kb2, (HIDDEN,), jnp.float32, -bound2, bound2)
    bound3 = 1.0 / jnp.sqrt(HIDDEN)
    w3 = jax.random.uniform(kw3, (num_classes, HIDDEN), jnp.float32,
                            -bound3, bound3)
    b3 = jax.random.uniform(kb3, (num_classes,), jnp.float32, -bound3, bound3)

    # Path A: small batch -> single fused VMEM-resident kernel.
    x_small = jax.random.normal(kx, (8, F_IN), dtype=jnp.float32)
    out_a = jax.block_until_ready(
        fcnet_forward(x_small, gamma, beta, w2, b2, w3, b3))
    ref_a = fcnet_reference(x_small, gamma, beta, w2, b2, w3, b3)
    assert out_a.shape == (8, num_classes)
    assert jnp.allclose(out_a, ref_a, atol=2e-4, rtol=2e-4), "fused path mismatch"

    # Path B: force the streaming two-pass path with a ragged batch tail
    # (600 rows, tile 256 -> 3 blocks split 2-ways with a clamped duplicate),
    # exercising masked stats, the parallel split and partial edge blocks.
    x_big = jax.random.normal(kx2, (600, F_IN), dtype=jnp.float32)
    out_b = jax.block_until_ready(
        fcnet_forward(x_big, gamma, beta, w2, b2, w3, b3,
                      tile_n=256, fused_batch_limit=0))
    ref_b = fcnet_reference(x_big, gamma, beta, w2, b2, w3, b3)
    assert out_b.shape == (600, num_classes)
    assert jnp.allclose(out_b, ref_b, atol=2e-4, rtol=2e-4), "streaming path mismatch"

    print("KERNEL_OK")
</pallas_src>

<mosaic_0001>
module attributes {stable_mosaic.version = 11 : i64} {
  func.func @_fused_small_kernel(%arg0: memref<8x1344xf32, #tpu.memory_space<vmem>>, %arg1: memref<1x1344xf32, #tpu.memory_space<vmem>>, %arg2: memref<1x1344xf32, #tpu.memory_space<vmem>>, %arg3: memref<1344x32xf32, #tpu.memory_space<vmem>>, %arg4: memref<1x32xf32, #tpu.memory_space<vmem>>, %arg5: memref<32x128xf32, #tpu.memory_space<vmem>>, %arg6: memref<1x128xf32, #tpu.memory_space<vmem>>, %arg7: memref<8x128xf32, #tpu.memory_space<vmem>>) attributes {dimension_semantics = [], scalar_prefetch = 0 : i64, scratch_operands = 0 : i64, tpu.core_type = #tpu.core_type<tc>} {
    %c0 = arith.constant 0 : index
    %c0_0 = arith.constant 0 : index
    %0 = vector.load %arg0[%c0, %c0_0] : memref<8x1344xf32, #tpu.memory_space<vmem>>, vector<8x1344xf32>
    %cst = arith.constant dense<0.000000e+00> : vector<1344xf32>
    %1 = vector.multi_reduction <add>, %0, %cst [0] : vector<8x1344xf32> to vector<1344xf32>
    %2 = vector.shape_cast %1 : vector<1344xf32> to vector<1x1344xf32>
    %cst_1 = arith.constant 1.250000e-01 : f32
    %3 = vector.broadcast %cst_1 : f32 to vector<1x1344xf32>
    %4 = arith.mulf %2, %3 : vector<1x1344xf32>
    %5 = vector.broadcast %4 : vector<1x1344xf32> to vector<8x1344xf32>
    %6 = arith.subf %0, %5 : vector<8x1344xf32>
    %7 = arith.mulf %6, %6 : vector<8x1344xf32>
    %cst_2 = arith.constant dense<0.000000e+00> : vector<1344xf32>
    %8 = vector.multi_reduction <add>, %7, %cst_2 [0] : vector<8x1344xf32> to vector<1344xf32>
    %9 = vector.shape_cast %8 : vector<1344xf32> to vector<1x1344xf32>
    %cst_3 = arith.constant 1.250000e-01 : f32
    %10 = vector.broadcast %cst_3 : f32 to vector<1x1344xf32>
    %11 = arith.mulf %9, %10 : vector<1x1344xf32>
    %c0_4 = arith.constant 0 : index
    %c0_5 = arith.constant 0 : index
    %12 = vector.load %arg1[%c0_4, %c0_5] : memref<1x1344xf32, #tpu.memory_space<vmem>>, vector<1x1344xf32>
    %cst_6 = arith.constant 9.99999974E-6 : f32
    %13 = vector.broadcast %cst_6 : f32 to vector<1x1344xf32>
    %14 = arith.addf %11, %13 : vector<1x1344xf32>
    %15 = math.rsqrt %14 : vector<1x1344xf32>
    %16 = arith.mulf %12, %15 : vector<1x1344xf32>
    %17 = vector.broadcast %16 : vector<1x1344xf32> to vector<8x1344xf32>
    %18 = arith.mulf %6, %17 : vector<8x1344xf32>
    %c0_7 = arith.constant 0 : index
    %c0_8 = arith.constant 0 : index
    %19 = vector.load %arg2[%c0_7, %c0_8] : memref<1x1344xf32, #tpu.memory_space<vmem>>, vector<1x1344xf32>
    %20 = vector.broadcast %19 : vector<1x1344xf32> to vector<8x1344xf32>
    %21 = arith.addf %18, %20 : vector<8x1344xf32>
    %c0_9 = arith.constant 0 : index
    %c0_10 = arith.constant 0 : index
    %22 = vector.load %arg3[%c0_9, %c0_10] : memref<1344x32xf32, #tpu.memory_space<vmem>>, vector<1344x32xf32>
    %cst_11 = arith.constant dense<0.000000e+00> : vector<8x32xf32>
    %23 = tpu.matmul %21, %22, %cst_11 {dimension_numbers = #tpu.dot_dimension_numbers<[1], [0], [0], [1], [0, 0, 1, 1], [], []>} : vector<8x1344xf32>, vector<1344x32xf32>, vector<8x32xf32> -> vector<8x32xf32>
    %c0_12 = arith.constant 0 : index
    %c0_13 = arith.constant 0 : index
    %24 = vector.load %arg4[%c0_12, %c0_13] : memref<1x32xf32, #tpu.memory_space<vmem>>, vector<1x32xf32>
    %25 = vector.broadcast %24 : vector<1x32xf32> to vector<8x32xf32>
    %26 = arith.addf %23, %25 : vector<8x32xf32>
    %c0_14 = arith.constant 0 : index
    %c0_15 = arith.constant 0 : index
    %27 = vector.load %arg5[%c0_14, %c0_15] : memref<32x128xf32, #tpu.memory_space<vmem>>, vector<32x128xf32>
    %cst_16 = arith.constant dense<0.000000e+00> : vector<8x128xf32>
    %28 = tpu.matmul %26, %27, %cst_16 {dimension_numbers = #tpu.dot_dimension_numbers<[1], [0], [0], [1], [0, 0, 1, 1], [], []>} : vector<8x32xf32>, vector<32x128xf32>, vector<8x128xf32> -> vector<8x128xf32>
    %c0_17 = arith.constant 0 : index
    %c0_18 = arith.constant 0 : index
    %29 = vector.load %arg6[%c0_17, %c0_18] : memref<1x128xf32, #tpu.memory_space<vmem>>, vector<1x128xf32>
    %30 = vector.broadcast %29 : vector<1x128xf32> to vector<8x128xf32>
    %31 = arith.addf %28, %30 : vector<8x128xf32>
    %c0_19 = arith.constant 0 : index
    %c0_20 = arith.constant 0 : index
    %32 = vector.load %arg7[%c0_19, %c0_20] : memref<8x128xf32, #tpu.memory_space<vmem>>, vector<8x128xf32>
    tpu.vector_store %arg7[%c0_19, %c0_20], %31 {strides = array<i32>} : memref<8x128xf32, #tpu.memory_space<vmem>>, vector<8x128xf32>,
    return
  }
}

</mosaic_0001>

<llo_original>
// kernel: tpu_custom_call.1
$region0: #{tpu_custom_call.1}
  #allocation0 [shape = 'u32[]', space=smem, size = 0x4, offset = 0x4, fixed_abs, tag = 'smem constant byte address 0x4 - core index']
  #allocation1 [shape = 'u32[144,128]{1,0:T(1,128)}', space=vmem, size = 0x12000, scoped, tag = 'internal scratch']
  %s0 = inlined_call_operand.vmem [shape: f32[8,1344], index: 0, kind: input, shape index: {}]
  %s1 = inlined_call_operand.vmem [shape: f32[1,1344], index: 1, kind: input, shape index: {}]
  %s2 = inlined_call_operand.vmem [shape: f32[1,1344], index: 2, kind: input, shape index: {}]
  %s3 = inlined_call_operand.vmem [shape: f32[1344,32], index: 3, kind: input, shape index: {}]
  %s4 = inlined_call_operand.vmem [shape: f32[1,32], index: 4, kind: input, shape index: {}]
  %s5 = inlined_call_operand.vmem [shape: f32[32,128], index: 5, kind: input, shape index: {}]
  %s6 = inlined_call_operand.vmem [shape: f32[1,128], index: 6, kind: input, shape index: {}]
  %s7 = inlined_call_operand.hbm [shape: f32[8,128], index: 7, kind: output, shape index: {}]
  %s8 = sld [smem:[#allocation0]]
  $region38: #{tpu_custom_call.1} parent=0
    _
  %s10 = ssub.s32 1, %s8
  %s11 = scalar_select 0, %s10, %s8
  $region1: #{tpu_custom_call.1} parent=0
    #allocation2 [shape = 'u8[4096]{0}', space=vmem, size = 0x1000, scoped, tag = 'output window, operand 0, single buffered']
    #allocation3 [shape = 's32[1]{0}', space=sflag, size = 0x4, scoped, tag = 'scoped memory for tpu_custom_call.1']
    %12 = vsyncpa [#allocation3], 0
    // Predicated region
    $region2: #{tpu_custom_call.1} parent=1 // pred_check
      _
    $region3: #{tpu_custom_call.1} parent=1 // pred_check_branch
      %14 = sbr.rel (0) target = $region5
    $region4: #{tpu_custom_call.1} parent=1 // pred_region
      _
    $region5: #{tpu_custom_call.1} parent=1 // pred_fallthru
      _
    // Predicated region
    $region6: #{tpu_custom_call.1} parent=1 // pred_check
      _
    $region7: #{tpu_custom_call.1} parent=1 // pred_check_branch
      %16 = sbr.rel (0) target = $region9
    $region8: #{tpu_custom_call.1} parent=1 // pred_region
      _
    $region9: #{tpu_custom_call.1} parent=1 // pred_fallthru
      _
    // Predicated region
    $region10: #{tpu_custom_call.1} parent=1 // pred_check
      _
    $region11: #{tpu_custom_call.1} parent=1 // pred_check_branch
      %18 = sbr.rel (0) target = $region13
    $region12: #{tpu_custom_call.1} parent=1 // pred_region
      _
    $region13: #{tpu_custom_call.1} parent=1 // pred_fallthru
      _
    // Predicated region
    $region14: #{tpu_custom_call.1} parent=1 // pred_check
      _
    $region15: #{tpu_custom_call.1} parent=1 // pred_check_branch
      %20 = sbr.rel (0) target = $region17
    $region16: #{tpu_custom_call.1} parent=1 // pred_region
      _
    $region17: #{tpu_custom_call.1} parent=1 // pred_fallthru
      _
    // Predicated region
    $region18: #{tpu_custom_call.1} parent=1 // pred_check
      _
    $region19: #{tpu_custom_call.1} parent=1 // pred_check_branch
      %22 = sbr.rel (0) target = $region21
    $region20: #{tpu_custom_call.1} parent=1 // pred_region
      _
    $region21: #{tpu_custom_call.1} parent=1 // pred_fallthru
      _
    // Predicated region
    $region22: #{tpu_custom_call.1} parent=1 // pred_check
      _
    $region23: #{tpu_custom_call.1} parent=1 // pred_check_branch
      %24 = sbr.rel (0) target = $region25
    $region24: #{tpu_custom_call.1} parent=1 // pred_region
      _
    $region25: #{tpu_custom_call.1} parent=1 // pred_fallthru
      _
    // Predicated region
    $region26: #{tpu_custom_call.1} parent=1 // pred_check
      _
    $region27: #{tpu_custom_call.1} parent=1 // pred_check_branch
      %26 = sbr.rel (0) target = $region29
    $region28: #{tpu_custom_call.1} parent=1 // pred_region
      _
    $region29: #{tpu_custom_call.1} parent=1 // pred_fallthru
      _
    %v27 = vld [vmem:[%s0] sm:$0xff]
    %v28 = vld [vmem:[%s0 + $0x8] sm:$0xff]
    %v29 = vld [vmem:[%s0 + $0x10] sm:$0xff]
    %v30 = vld [vmem:[%s0 + $0x18] sm:$0xff]
    %v31 = vld [vmem:[%s0 + $0x20] sm:$0xff]
    %v32 = vld [vmem:[%s0 + $0x28] sm:$0xff]
    %v33 = vld [vmem:[%s0 + $0x30] sm:$0xff]
    %v34 = vld [vmem:[%s0 + $0x38] sm:$0xff]
    %v35 = vld [vmem:[%s0 + $0x40] sm:$0xff]
    %v36 = vld [vmem:[%s0 + $0x48] sm:$0xff]
    %v37 = vld [vmem:[%s0 + $0x50] sm:$0xff]
    %v38 = vrot.slane %v27, 4
    %v39 = vadd.f32 %v27, %v38
    %v40 = vrot.slane %v39, 2
    %v41 = vadd.f32 %v39, %v40
    %v42 = vrot.slane %v41, 1
    %v43 = vadd.f32 %v41, %v42
    %v44 = vrot.slane %v28, 4
    %v45 = vadd.f32 %v28, %v44
    %v46 = vrot.slane %v45, 2
    %v47 = vadd.f32 %v45, %v46
    %v48 = vrot.slane %v47, 1
    %v49 = vadd.f32 %v47, %v48
    %v50 = vrot.slane %v29, 4
    %v51 = vadd.f32 %v29, %v50
    %v52 = vrot.slane %v51, 2
    %v53 = vadd.f32 %v51, %v52
    %v54 = vrot.slane %v53, 1
    %v55 = vadd.f32 %v53, %v54
    %v56 = vrot.slane %v30, 4
    %v57 = vadd.f32 %v30, %v56
    %v58 = vrot.slane %v57, 2
    %v59 = vadd.f32 %v57, %v58
    %v60 = vrot.slane %v59, 1
    %v61 = vadd.f32 %v59, %v60
    %v62 = vrot.slane %v31, 4
    %v63 = vadd.f32 %v31, %v62
    %v64 = vrot.slane %v63, 2
    %v65 = vadd.f32 %v63, %v64
    %v66 = vrot.slane %v65, 1
    %v67 = vadd.f32 %v65, %v66
    %v68 = vrot.slane %v32, 4
    %v69 = vadd.f32 %v32, %v68
    %v70 = vrot.slane %v69, 2
    %v71 = vadd.f32 %v69, %v70
    %v72 = vrot.slane %v71, 1
    %v73 = vadd.f32 %v71, %v72
    %v74 = vrot.slane %v33, 4
    %v75 = vadd.f32 %v33, %v74
    %v76 = vrot.slane %v75, 2
    %v77 = vadd.f32 %v75, %v76
    %v78 = vrot.slane %v77, 1
    %v79 = vadd.f32 %v77, %v78
    %v80 = vrot.slane %v34, 4
    %v81 = vadd.f32 %v34, %v80
    %v82 = vrot.slane %v81, 2
    %v83 = vadd.f32 %v81, %v82
    %v84 = vrot.slane %v83, 1
    %v85 = vadd.f32 %v83, %v84
    %v86 = vrot.slane %v35, 4
    %v87 = vadd.f32 %v35, %v86
    %v88 = vrot.slane %v87, 2
    %v89 = vadd.f32 %v87, %v88
    %v90 = vrot.slane %v89, 1
    %v91 = vadd.f32 %v89, %v90
    %v92 = vrot.slane %v36, 4
    %v93 = vadd.f32 %v36, %v92
    %v94 = vrot.slane %v93, 2
    %v95 = vadd.f32 %v93, %v94
    %v96 = vrot.slane %v95, 1
    %v97 = vadd.f32 %v95, %v96
    %vm98 = vcmask 523264
    %v99 = vsel %vm98, %v37, 0.0
    %v100 = vrot.slane %v99, 4
    %v101 = vadd.f32 %v99, %v100
    %v102 = vrot.slane %v101, 2
    %v103 = vadd.f32 %v101, %v102
    %v104 = vrot.slane %v103, 1
    %v105 = vadd.f32 %v103, %v104
    %v106 = vmul.f32 %v43, 0.125
    %v107 = vmul.f32 %v49, 0.125
    %v108 = vmul.f32 %v55, 0.125
    %v109 = vmul.f32 %v61, 0.125
    %v110 = vmul.f32 %v67, 0.125
    %v111 = vmul.f32 %v73, 0.125
    %v112 = vmul.f32 %v79, 0.125
    %v113 = vmul.f32 %v85, 0.125
    %v114 = vmul.f32 %v91, 0.125
    %v115 = vmul.f32 %v97, 0.125
    %v116 = vmul.f32 %v105, 0.125
    %v117 = vsub.f32 %v27, %v106
    %v118 = vsub.f32 %v28, %v107
    %v119 = vsub.f32 %v29, %v108
    %v120 = vsub.f32 %v30, %v109
    %v121 = vsub.f32 %v31, %v110
    %v122 = vsub.f32 %v32, %v111
    %v123 = vsub.f32 %v33, %v112
    %v124 = vsub.f32 %v34, %v113
    %v125 = vsub.f32 %v35, %v114
    %v126 = vsub.f32 %v36, %v115
    %v127 = vsub.f32 %v37, %v116
    %v128 = vmul.f32 %v117, %v117
    %v129 = vmul.f32 %v118, %v118
    %v130 = vmul.f32 %v119, %v119
    %v131 = vmul.f32 %v120, %v120
    %v132 = vmul.f32 %v121, %v121
    %v133 = vmul.f32 %v122, %v122
    %v134 = vmul.f32 %v123, %v123
    %v135 = vmul.f32 %v124, %v124
    %v136 = vmul.f32 %v125, %v125
    %v137 = vmul.f32 %v126, %v126
    %v138 = vmul.f32 %v127, %v127
    %v139 = vrot.slane %v128, 4
    %v140 = vadd.f32 %v128, %v139
    %v141 = vrot.slane %v140, 2
    %v142 = vadd.f32 %v140, %v141
    %v143 = vrot.slane %v142, 1
    %v144 = vadd.f32 %v142, %v143
    %v145 = vrot.slane %v129, 4
    %v146 = vadd.f32 %v129, %v145
    %v147 = vrot.slane %v146, 2
    %v148 = vadd.f32 %v146, %v147
    %v149 = vrot.slane %v148, 1
    %v150 = vadd.f32 %v148, %v149
    %v151 = vrot.slane %v130, 4
    %v152 = vadd.f32 %v130, %v151
    %v153 = vrot.slane %v152, 2
    %v154 = vadd.f32 %v152, %v153
    %v155 = vrot.slane %v154, 1
    %v156 = vadd.f32 %v154, %v155
    %v157 = vrot.slane %v131, 4
    %v158 = vadd.f32 %v131, %v157
    %v159 = vrot.slane %v158, 2
    %v160 = vadd.f32 %v158, %v159
    %v161 = vrot.slane %v160, 1
    %v162 = vadd.f32 %v160, %v161
    %v163 = vrot.slane %v132, 4
    %v164 = vadd.f32 %v132, %v163
    %v165 = vrot.slane %v164, 2
    %v166 = vadd.f32 %v164, %v165
    %v167 = vrot.slane %v166, 1
    %v168 = vadd.f32 %v166, %v167
    %v169 = vrot.slane %v133, 4
    %v170 = vadd.f32 %v133, %v169
    %v171 = vrot.slane %v170, 2
    %v172 = vadd.f32 %v170, %v171
    %v173 = vrot.slane %v172, 1
    %v174 = vadd.f32 %v172, %v173
    %v175 = vrot.slane %v134, 4
    %v176 = vadd.f32 %v134, %v175
    %v177 = vrot.slane %v176, 2
    %v178 = vadd.f32 %v176, %v177
    %v179 = vrot.slane %v178, 1
    %v180 = vadd.f32 %v178, %v179
    %v181 = vrot.slane %v135, 4
    %v182 = vadd.f32 %v135, %v181
    %v183 = vrot.slane %v182, 2
    %v184 = vadd.f32 %v182, %v183
    %v185 = vrot.slane %v184, 1
    %v186 = vadd.f32 %v184, %v185
    %v187 = vrot.slane %v136, 4
    %v188 = vadd.f32 %v136, %v187
    %v189 = vrot.slane %v188, 2
    %v190 = vadd.f32 %v188, %v189
    %v191 = vrot.slane %v190, 1
    %v192 = vadd.f32 %v190, %v191
    %v193 = vrot.slane %v137, 4
    %v194 = vadd.f32 %v137, %v193
    %v195 = vrot.slane %v194, 2
    %v196 = vadd.f32 %v194, %v195
    %v197 = vrot.slane %v196, 1
    %v198 = vadd.f32 %v196, %v197
    %v199 = vsel %vm98, %v138, 0.0
    %v200 = vrot.slane %v199, 4
    %v201 = vadd.f32 %v199, %v200
    %v202 = vrot.slane %v201, 2
    %v203 = vadd.f32 %v201, %v202
    %v204 = vrot.slane %v203, 1
    %v205 = vadd.f32 %v203, %v204
    %v206 = vmul.f32 %v144, 0.125
    %v207 = vmul.f32 %v150, 0.125
    %v208 = vmul.f32 %v156, 0.125
    %v209 = vmul.f32 %v162, 0.125
    %v210 = vmul.f32 %v168, 0.125
    %v211 = vmul.f32 %v174, 0.125
    %v212 = vmul.f32 %v180, 0.125
    %v213 = vmul.f32 %v186, 0.125
    %v214 = vmul.f32 %v192, 0.125
    %v215 = vmul.f32 %v198, 0.125
    %v216 = vmul.f32 %v205, 0.125
    %v217 = vld [vmem:[%s1] sm:$0xff]
    %v218 = vld [vmem:[%s1 + $0x8] sm:$0x7]
    %v219 = vadd.f32 %v206, 1e-05
    %v220 = vadd.f32 %v207, 1e-05
    %v221 = vadd.f32 %v208, 1e-05
    %v222 = vadd.f32 %v209, 1e-05
    %v223 = vadd.f32 %v210, 1e-05
    %v224 = vadd.f32 %v211, 1e-05
    %v225 = vadd.f32 %v212, 1e-05
    %v226 = vadd.f32 %v213, 1e-05
    %v227 = vadd.f32 %v214, 1e-05
    %v228 = vadd.f32 %v215, 1e-05
    %v229 = vadd.f32 %v216, 1e-05
    %v230 = vrsqrt.pop %v219
    %v231 = vrsqrt.pop %v220
    %v232 = vrsqrt.pop %v221
    %v233 = vrsqrt.pop %v222
    %v234 = vrsqrt.pop %v223
    %v235 = vrsqrt.pop %v224
    %v236 = vrsqrt.pop %v225
    %v237 = vrsqrt.pop %v226
    %v238 = vrsqrt.pop %v227
    %v239 = vrsqrt.pop %v228
    %v240 = vrsqrt.pop %v229
    %v252 = vcombine.low %v230, %v231
    %v253 = vcombine.low %v232, %v233
    %v254 = vcombine.low %v234, %v235
    %v255 = vcombine.low %v236, %v237
    %v257 = vunpack.c.l.s4 1966171168
    %v258 = vunpack.c.0.s8 %v257
    %v259 = vlaneseq
    %v260 = vshrl.u32 %v259, 7
    %v261 = vsub.s32 %v258, %v260
    %v262 = vrot.slane %v252, %v261
    %v264 = vunpack.c.l.s4 1966171168
    %v265 = vunpack.c.0.s8 %v264
    %v266 = vlaneseq
    %v267 = vshrl.u32 %v266, 7
    %v268 = vsub.s32 %v265, %v267
    %v269 = vrot.slane %v253, %v268
    %v271 = vunpack.c.l.s4 1966171168
    %v272 = vunpack.c.0.s8 %v271
    %v273 = vlaneseq
    %v274 = vshrl.u32 %v273, 7
    %v275 = vsub.s32 %v272, %v274
    %v276 = vrot.slane %v254, %v275
    %v278 = vunpack.c.l.s4 1966171168
    %v279 = vunpack.c.0.s8 %v278
    %v280 = vlaneseq
    %v281 = vshrl.u32 %v280, 7
    %v282 = vsub.s32 %v279, %v281
    %v283 = vrot.slane %v255, %v282
    %v284 = vcombine.low %v262, %v269
    %v285 = vcombine.low %v276, %v283
    %v287 = vunpack.c.l.s4 1966171168
    %v288 = vunpack.c.0.s8 %v287
    %v289 = vlaneseq
    %v290 = vshrl.u32 %v289, 7
    %v291 = vsub.s32 %v288, %v290
    %v292 = vrot.slane %v284, %v291
    %v294 = vunpack.c.l.s4 1966171168
    %v295 = vunpack.c.0.s8 %v294
    %v296 = vlaneseq
    %v297 = vshrl.u32 %v296, 7
    %v298 = vsub.s32 %v295, %v297
    %v299 = vrot.slane %v285, %v298
    %v300 = vcombine.low %v292, %v299
    %v301 = vcombine.low %v238, %v239
    %v303 = vunpack.c.l.s4 1966171168
    %v304 = vunpack.c.0.s8 %v303
    %v305 = vlaneseq
    %v306 = vshrl.u32 %v305, 7
    %v307 = vsub.s32 %v304, %v306
    %v308 = vrot.slane %v301, %v307
    %v310 = vunpack.c.l.s4 1966171168
    %v311 = vunpack.c.0.s8 %v310
    %v312 = vlaneseq
    %v313 = vshrl.u32 %v312, 7
    %v314 = vsub.s32 %v311, %v313
    %v315 = vrot.slane %v240, %v314
    %v316 = vcombine.low %v308, %v315
    %v318 = vunpack.c.l.s4 1966171168
    %v319 = vunpack.c.0.s8 %v318
    %v320 = vlaneseq
    %v321 = vshrl.u32 %v320, 7
    %v322 = vsub.s32 %v319, %v321
    %v323 = vrot.slane %v316, %v322
    %v326 = vmul.f32 %v217, %v300
    %v327 = vmul.f32 %v218, %v323
    %v330 = vlaneseq
    %v331 = vshrl.u32 %v330, 7
    %v332 = vsub.s32 0, %v331
    %v333 = vrot.slane %v326, %v332
    %v334 = vlaneseq
    %v335 = vshrl.u32 %v334, 7
    %v336 = vsub.s32 1, %v335
    %v337 = vrot.slane %v326, %v336
    %v338 = vlaneseq
    %v339 = vshrl.u32 %v338, 7
    %v340 = vsub.s32 2, %v339
    %v341 = vrot.slane %v326, %v340
    %v342 = vlaneseq
    %v343 = vshrl.u32 %v342, 7
    %v344 = vsub.s32 3, %v343
    %v345 = vrot.slane %v326, %v344
    %v346 = vlaneseq
    %v347 = vshrl.u32 %v346, 7
    %v348 = vsub.s32 4, %v347
    %v349 = vrot.slane %v326, %v348
    %v350 = vlaneseq
    %v351 = vshrl.u32 %v350, 7
    %v352 = vsub.s32 5, %v351
    %v353 = vrot.slane %v326, %v352
    %v354 = vlaneseq
    %v355 = vshrl.u32 %v354, 7
    %v356 = vsub.s32 6, %v355
    %v357 = vrot.slane %v326, %v356
    %v358 = vlaneseq
    %v359 = vshrl.u32 %v358, 7
    %v360 = vsub.s32 7, %v359
    %v361 = vrot.slane %v326, %v360
    %v362 = vlaneseq
    %v363 = vshrl.u32 %v362, 7
    %v364 = vsub.s32 0, %v363
    %v365 = vrot.slane %v327, %v364
    %v366 = vlaneseq
    %v367 = vshrl.u32 %v366, 7
    %v368 = vsub.s32 1, %v367
    %v369 = vrot.slane %v327, %v368
    %v370 = vlaneseq
    %v371 = vshrl.u32 %v370, 7
    %v372 = vsub.s32 2, %v371
    %v373 = vrot.slane %v327, %v372
    %v385 = vmul.f32 %v117, %v333
    %v386 = vmul.f32 %v118, %v337
    %v387 = vmul.f32 %v119, %v341
    %v388 = vmul.f32 %v120, %v345
    %v389 = vmul.f32 %v121, %v349
    %v390 = vmul.f32 %v122, %v353
    %v391 = vmul.f32 %v123, %v357
    %v392 = vmul.f32 %v124, %v361
    %v393 = vmul.f32 %v125, %v365
    %v394 = vmul.f32 %v126, %v369
    %v395 = vmul.f32 %v127, %v373
    %v396 = vld [vmem:[%s2] sm:$0xff]
    %v397 = vld [vmem:[%s2 + $0x8] sm:$0x7]
    %v400 = vlaneseq
    %v401 = vshrl.u32 %v400, 7
    %v402 = vsub.s32 0, %v401
    %v403 = vrot.slane %v396, %v402
    %v404 = vlaneseq
    %v405 = vshrl.u32 %v404, 7
    %v406 = vsub.s32 1, %v405
    %v407 = vrot.slane %v396, %v406
    %v408 = vlaneseq
    %v409 = vshrl.u32 %v408, 7
    %v410 = vsub.s32 2, %v409
    %v411 = vrot.slane %v396, %v410
    %v412 = vlaneseq
    %v413 = vshrl.u32 %v412, 7
    %v414 = vsub.s32 3, %v413
    %v415 = vrot.slane %v396, %v414
    %v416 = vlaneseq
    %v417 = vshrl.u32 %v416, 7
    %v418 = vsub.s32 4, %v417
    %v419 = vrot.slane %v396, %v418
    %v420 = vlaneseq
    %v421 = vshrl.u32 %v420, 7
    %v422 = vsub.s32 5, %v421
    %v423 = vrot.slane %v396, %v422
    %v424 = vlaneseq
    %v425 = vshrl.u32 %v424, 7
    %v426 = vsub.s32 6, %v425
    %v427 = vrot.slane %v396, %v426
    %v428 = vlaneseq
    %v429 = vshrl.u32 %v428, 7
    %v430 = vsub.s32 7, %v429
    %v431 = vrot.slane %v396, %v430
    %v432 = vlaneseq
    %v433 = vshrl.u32 %v432, 7
    %v434 = vsub.s32 0, %v433
    %v435 = vrot.slane %v397, %v434
    %v436 = vlaneseq
    %v437 = vshrl.u32 %v436, 7
    %v438 = vsub.s32 1, %v437
    %v439 = vrot.slane %v397, %v438
    %v440 = vlaneseq
    %v441 = vshrl.u32 %v440, 7
    %v442 = vsub.s32 2, %v441
    %v443 = vrot.slane %v397, %v442
    %v455 = vadd.f32 %v385, %v403
    %v456 = vadd.f32 %v386, %v407
    %v457 = vadd.f32 %v387, %v411
    %v458 = vadd.f32 %v388, %v415
    %v459 = vadd.f32 %v389, %v419
    %v460 = vadd.f32 %v390, %v423
    %v461 = vadd.f32 %v391, %v427
    %v462 = vadd.f32 %v392, %v431
    %v463 = vadd.f32 %v393, %v435
    %v464 = vadd.f32 %v394, %v439
    %v465 = vadd.f32 %v395, %v443
    %v466 = vld [vmem:[%s3] sm:$0xff]
    %v467 = vld [vmem:[%s3 + $0x8] sm:$0xff]
    %v468 = vld [vmem:[%s3 + $0x10] sm:$0xff]
    %v469 = vld [vmem:[%s3 + $0x18] sm:$0xff]
    %v470 = vld [vmem:[%s3 + $0x20] sm:$0xff]
    %v471 = vld [vmem:[%s3 + $0x28] sm:$0xff]
    %v472 = vld [vmem:[%s3 + $0x30] sm:$0xff]
    %v473 = vld [vmem:[%s3 + $0x38] sm:$0xff]
    %v474 = vld [vmem:[%s3 + $0x40] sm:$0xff]
    %v475 = vld [vmem:[%s3 + $0x48] sm:$0xff]
    %v476 = vld [vmem:[%s3 + $0x50] sm:$0xff]
    %v477 = vld [vmem:[%s3 + $0x58] sm:$0xff]
    %v478 = vld [vmem:[%s3 + $0x60] sm:$0xff]
    %v479 = vld [vmem:[%s3 + $0x68] sm:$0xff]
    %v480 = vld [vmem:[%s3 + $0x70] sm:$0xff]
    %v481 = vld [vmem:[%s3 + $0x78] sm:$0xff]
    %v482 = vld [vmem:[%s3 + $0x80] sm:$0xff]
    %v483 = vld [vmem:[%s3 + $0x88] sm:$0xff]
    %v484 = vld [vmem:[%s3 + $0x90] sm:$0xff]
    %v485 = vld [vmem:[%s3 + $0x98] sm:$0xff]
    %v486 = vld [vmem:[%s3 + $0xa0] sm:$0xff]
    %v487 = vld [vmem:[%s3 + $0xa8] sm:$0xff]
    %v488 = vld [vmem:[%s3 + $0xb0] sm:$0xff]
    %v489 = vld [vmem:[%s3 + $0xb8] sm:$0xff]
    %v490 = vld [vmem:[%s3 + $0xc0] sm:$0xff]
    %v491 = vld [vmem:[%s3 + $0xc8] sm:$0xff]
    %v492 = vld [vmem:[%s3 + $0xd0] sm:$0xff]
    %v493 = vld [vmem:[%s3 + $0xd8] sm:$0xff]
    %v494 = vld [vmem:[%s3 + $0xe0] sm:$0xff]
    %v495 = vld [vmem:[%s3 + $0xe8] sm:$0xff]
    %v496 = vld [vmem:[%s3 + $0xf0] sm:$0xff]
    %v497 = vld [vmem:[%s3 + $0xf8] sm:$0xff]
    %v498 = vld [vmem:[%s3 + $0x100] sm:$0xff]
    %v499 = vld [vmem:[%s3 + $0x108] sm:$0xff]
    %v500 = vld [vmem:[%s3 + $0x110] sm:$0xff]
    %v501 = vld [vmem:[%s3 + $0x118] sm:$0xff]
    %v502 = vld [vmem:[%s3 + $0x120] sm:$0xff]
    %v503 = vld [vmem:[%s3 + $0x128] sm:$0xff]
    %v504 = vld [vmem:[%s3 + $0x130] sm:$0xff]
    %v505 = vld [vmem:[%s3 + $0x138] sm:$0xff]
    %v506 = vld [vmem:[%s3 + $0x140] sm:$0xff]
    %v507 = vld [vmem:[%s3 + $0x148] sm:$0xff]
    %v508 = vld [vmem:[%s3 + $0x150] sm:$0xff]
    %v509 = vld [vmem:[%s3 + $0x158] sm:$0xff]
    %v510 = vld [vmem:[%s3 + $0x160] sm:$0xff]
    %v511 = vld [vmem:[%s3 + $0x168] sm:$0xff]
    %v512 = vld [vmem:[%s3 + $0x170] sm:$0xff]
    %v513 = vld [vmem:[%s3 + $0x178] sm:$0xff]
    %v514 = vld [vmem:[%s3 + $0x180] sm:$0xff]
    %v515 = vld [vmem:[%s3 + $0x188] sm:$0xff]
    %v516 = vld [vmem:[%s3 + $0x190] sm:$0xff]
    %v517 = vld [vmem:[%s3 + $0x198] sm:$0xff]
    %v518 = vld [vmem:[%s3 + $0x1a0] sm:$0xff]
    %v519 = vld [vmem:[%s3 + $0x1a8] sm:$0xff]
    %v520 = vld [vmem:[%s3 + $0x1b0] sm:$0xff]
    %v521 = vld [vmem:[%s3 + $0x1b8] sm:$0xff]
    %v522 = vld [vmem:[%s3 + $0x1c0] sm:$0xff]
    %v523 = vld [vmem:[%s3 + $0x1c8] sm:$0xff]
    %v524 = vld [vmem:[%s3 + $0x1d0] sm:$0xff]
    %v525 = vld [vmem:[%s3 + $0x1d8] sm:$0xff]
    %v526 = vld [vmem:[%s3 + $0x1e0] sm:$0xff]
    %v527 = vld [vmem:[%s3 + $0x1e8] sm:$0xff]
    %v528 = vld [vmem:[%s3 + $0x1f0] sm:$0xff]
    %v529 = vld [vmem:[%s3 + $0x1f8] sm:$0xff]
    %v530 = vld [vmem:[%s3 + $0x200] sm:$0xff]
    %v531 = vld [vmem:[%s3 + $0x208] sm:$0xff]
    %v532 = vld [vmem:[%s3 + $0x210] sm:$0xff]
    %v533 = vld [vmem:[%s3 + $0x218] sm:$0xff]
    %v534 = vld [vmem:[%s3 + $0x220] sm:$0xff]
    %v535 = vld [vmem:[%s3 + $0x228] sm:$0xff]
    %v536 = vld [vmem:[%s3 + $0x230] sm:$0xff]
    %v537 = vld [vmem:[%s3 + $0x238] sm:$0xff]
    %v538 = vld [vmem:[%s3 + $0x240] sm:$0xff]
    %v539 = vld [vmem:[%s3 + $0x248] sm:$0xff]
    %v540 = vld [vmem:[%s3 + $0x250] sm:$0xff]
    %v541 = vld [vmem:[%s3 + $0x258] sm:$0xff]
    %v542 = vld [vmem:[%s3 + $0x260] sm:$0xff]
    %v543 = vld [vmem:[%s3 + $0x268] sm:$0xff]
    %v544 = vld [vmem:[%s3 + $0x270] sm:$0xff]
    %v545 = vld [vmem:[%s3 + $0x278] sm:$0xff]
    %v546 = vld [vmem:[%s3 + $0x280] sm:$0xff]
    %v547 = vld [vmem:[%s3 + $0x288] sm:$0xff]
    %v548 = vld [vmem:[%s3 + $0x290] sm:$0xff]
    %v549 = vld [vmem:[%s3 + $0x298] sm:$0xff]
    %v550 = vld [vmem:[%s3 + $0x2a0] sm:$0xff]
    %v551 = vld [vmem:[%s3 + $0x2a8] sm:$0xff]
    %v552 = vld [vmem:[%s3 + $0x2b0] sm:$0xff]
    %v553 = vld [vmem:[%s3 + $0x2b8] sm:$0xff]
    %v554 = vld [vmem:[%s3 + $0x2c0] sm:$0xff]
    %v555 = vld [vmem:[%s3 + $0x2c8] sm:$0xff]
    %v556 = vld [vmem:[%s3 + $0x2d0] sm:$0xff]
    %v557 = vld [vmem:[%s3 + $0x2d8] sm:$0xff]
    %v558 = vld [vmem:[%s3 + $0x2e0] sm:$0xff]
    %v559 = vld [vmem:[%s3 + $0x2e8] sm:$0xff]
    %v560 = vld [vmem:[%s3 + $0x2f0] sm:$0xff]
    %v561 = vld [vmem:[%s3 + $0x2f8] sm:$0xff]
    %v562 = vld [vmem:[%s3 + $0x300] sm:$0xff]
    %v563 = vld [vmem:[%s3 + $0x308] sm:$0xff]
    %v564 = vld [vmem:[%s3 + $0x310] sm:$0xff]
    %v565 = vld [vmem:[%s3 + $0x318] sm:$0xff]
    %v566 = vld [vmem:[%s3 + $0x320] sm:$0xff]
    %v567 = vld [vmem:[%s3 + $0x328] sm:$0xff]
    %v568 = vld [vmem:[%s3 + $0x330] sm:$0xff]
    %v569 = vld [vmem:[%s3 + $0x338] sm:$0xff]
    %v570 = vld [vmem:[%s3 + $0x340] sm:$0xff]
    %v571 = vld [vmem:[%s3 + $0x348] sm:$0xff]
    %v572 = vld [vmem:[%s3 + $0x350] sm:$0xff]
    %v573 = vld [vmem:[%s3 + $0x358] sm:$0xff]
    %v574 = vld [vmem:[%s3 + $0x360] sm:$0xff]
    %v575 = vld [vmem:[%s3 + $0x368] sm:$0xff]
    %v576 = vld [vmem:[%s3 + $0x370] sm:$0xff]
    %v577 = vld [vmem:[%s3 + $0x378] sm:$0xff]
    %v578 = vld [vmem:[%s3 + $0x380] sm:$0xff]
    %v579 = vld [vmem:[%s3 + $0x388] sm:$0xff]
    %v580 = vld [vmem:[%s3 + $0x390] sm:$0xff]
    %v581 = vld [vmem:[%s3 + $0x398] sm:$0xff]
    %v582 = vld [vmem:[%s3 + $0x3a0] sm:$0xff]
    %v583 = vld [vmem:[%s3 + $0x3a8] sm:$0xff]
    %v584 = vld [vmem:[%s3 + $0x3b0] sm:$0xff]
    %v585 = vld [vmem:[%s3 + $0x3b8] sm:$0xff]
    %v586 = vld [vmem:[%s3 + $0x3c0] sm:$0xff]
    %v587 = vld [vmem:[%s3 + $0x3c8] sm:$0xff]
    %v588 = vld [vmem:[%s3 + $0x3d0] sm:$0xff]
    %v589 = vld [vmem:[%s3 + $0x3d8] sm:$0xff]
    %v590 = vld [vmem:[%s3 + $0x3e0] sm:$0xff]
    %v591 = vld [vmem:[%s3 + $0x3e8] sm:$0xff]
    %v592 = vld [vmem:[%s3 + $0x3f0] sm:$0xff]
    %v593 = vld [vmem:[%s3 + $0x3f8] sm:$0xff]
    %v594 = vld [vmem:[%s3 + $0x400] sm:$0xff]
    %v595 = vld [vmem:[%s3 + $0x408] sm:$0xff]
    %v596 = vld [vmem:[%s3 + $0x410] sm:$0xff]
    %v597 = vld [vmem:[%s3 + $0x418] sm:$0xff]
    %v598 = vld [vmem:[%s3 + $0x420] sm:$0xff]
    %v599 = vld [vmem:[%s3 + $0x428] sm:$0xff]
    %v600 = vld [vmem:[%s3 + $0x430] sm:$0xff]
    %v601 = vld [vmem:[%s3 + $0x438] sm:$0xff]
    %v602 = vld [vmem:[%s3 + $0x440] sm:$0xff]
    %v603 = vld [vmem:[%s3 + $0x448] sm:$0xff]
    %v604 = vld [vmem:[%s3 + $0x450] sm:$0xff]
    %v605 = vld [vmem:[%s3 + $0x458] sm:$0xff]
    %v606 = vld [vmem:[%s3 + $0x460] sm:$0xff]
    %v607 = vld [vmem:[%s3 + $0x468] sm:$0xff]
    %v608 = vld [vmem:[%s3 + $0x470] sm:$0xff]
    %v609 = vld [vmem:[%s3 + $0x478] sm:$0xff]
    %v610 = vld [vmem:[%s3 + $0x480] sm:$0xff]
    %v611 = vld [vmem:[%s3 + $0x488] sm:$0xff]
    %v612 = vld [vmem:[%s3 + $0x490] sm:$0xff]
    %v613 = vld [vmem:[%s3 + $0x498] sm:$0xff]
    %v614 = vld [vmem:[%s3 + $0x4a0] sm:$0xff]
    %v615 = vld [vmem:[%s3 + $0x4a8] sm:$0xff]
    %v616 = vld [vmem:[%s3 + $0x4b0] sm:$0xff]
    %v617 = vld [vmem:[%s3 + $0x4b8] sm:$0xff]
    %v618 = vld [vmem:[%s3 + $0x4c0] sm:$0xff]
    %v619 = vld [vmem:[%s3 + $0x4c8] sm:$0xff]
    %v620 = vld [vmem:[%s3 + $0x4d0] sm:$0xff]
    %v621 = vld [vmem:[%s3 + $0x4d8] sm:$0xff]
    %v622 = vld [vmem:[%s3 + $0x4e0] sm:$0xff]
    %v623 = vld [vmem:[%s3 + $0x4e8] sm:$0xff]
    %v624 = vld [vmem:[%s3 + $0x4f0] sm:$0xff]
    %v625 = vld [vmem:[%s3 + $0x4f8] sm:$0xff]
    %v626 = vld [vmem:[%s3 + $0x500] sm:$0xff]
    %v627 = vld [vmem:[%s3 + $0x508] sm:$0xff]
    %v628 = vld [vmem:[%s3 + $0x510] sm:$0xff]
    %v629 = vld [vmem:[%s3 + $0x518] sm:$0xff]
    %v630 = vld [vmem:[%s3 + $0x520] sm:$0xff]
    %v631 = vld [vmem:[%s3 + $0x528] sm:$0xff]
    %v632 = vld [vmem:[%s3 + $0x530] sm:$0xff]
    %v633 = vld [vmem:[%s3 + $0x538] sm:$0xff]
    %v634 = vld [vmem:[%s4] sm:$0x1]
    %v636 = vlaneseq
    %v637 = vshrl.u32 %v636, 7
    %v638 = vsub.s32 0, %v637
    %v639 = vrot.slane %v634, %v638
    %v642 = vsel %vm98, %v465, 0
    %644 = vmatprep.subr.mxu0 0.0
    %645 = vmatpush1.msra.mxu0 %v466
    %646 = vmatprep.subr.mxu0 0.0
    %647 = vmatpush1.msra.mxu0 %v467
    %648 = vmatprep.subr.mxu0 0.0
    %649 = vmatpush1.msra.mxu0 %v468
    %650 = vmatprep.subr.mxu0 0.0
    %651 = vmatpush1.msra.mxu0 %v469
    %652 = vmatprep.subr.mxu0 0.0
    %653 = vmatpush1.msra.mxu0 %v470
    %654 = vmatprep.subr.mxu0 0.0
    %655 = vmatpush1.msra.mxu0 %v471
    %656 = vmatprep.subr.mxu0 0.0
    %657 = vmatpush1.msra.mxu0 %v472
    %658 = vmatprep.subr.mxu0 0.0
    %659 = vmatpush1.msra.mxu0 %v473
    %660 = vmatprep.subr.mxu0 0.0
    %661 = vmatpush1.msra.mxu0 %v474
    %662 = vmatprep.subr.mxu0 0.0
    %663 = vmatpush1.msra.mxu0 %v475
    %664 = vmatprep.subr.mxu0 0.0
    %665 = vmatpush1.msra.mxu0 %v476
    %666 = vmatprep.subr.mxu0 0.0
    %667 = vmatpush1.msra.mxu0 %v477
    %668 = vmatprep.subr.mxu0 0.0
    %669 = vmatpush1.msra.mxu0 %v478
    %670 = vmatprep.subr.mxu0 0.0
    %671 = vmatpush1.msra.mxu0 %v479
    %672 = vmatprep.subr.mxu0 0.0
    %673 = vmatpush1.msra.mxu0 %v480
    %674 = vmatprep.subr.mxu0 0.0
    %675 = vmatpush1.msra.mxu0 %v481
    %676 = vmatprep.subr.mxu0 0.0
    %677 = vmatpush1.msra.mxu0 %v482
    %678 = vmatprep.subr.mxu0 0.0
    %679 = vmatpush1.msra.mxu0 %v483
    %680 = vmatprep.subr.mxu0 0.0
    %681 = vmatpush1.msra.mxu0 %v484
    %682 = vmatprep.subr.mxu0 0.0
    %683 = vmatpush1.msra.mxu0 %v485
    %684 = vmatprep.subr.mxu0 0.0
    %685 = vmatpush1.msra.mxu0 %v486
    %686 = vmatprep.subr.mxu0 0.0
    %687 = vmatpush1.msra.mxu0 %v487
    %688 = vmatprep.subr.mxu0 0.0
    %689 = vmatpush1.msra.mxu0 %v488
    %690 = vmatprep.subr.mxu0 0.0
    %691 = vmatpush1.msra.mxu0 %v489
    %692 = vmatprep.subr.mxu0 0.0
    %693 = vmatpush1.msra.mxu0 %v490
    %694 = vmatprep.subr.mxu0 0.0
    %695 = vmatpush1.msra.mxu0 %v491
    %696 = vmatprep.subr.mxu0 0.0
    %697 = vmatpush1.msra.mxu0 %v492
    %698 = vmatprep.subr.mxu0 0.0
    %699 = vmatpush1.msra.mxu0 %v493
    %700 = vmatprep.subr.mxu0 0.0
    %701 = vmatpush1.msra.mxu0 %v494
    %702 = vmatprep.subr.mxu0 0.0
    %703 = vmatpush1.msra.mxu0 %v495
    %704 = vmatprep.subr.mxu0 0.0
    %705 = vmatpush1.msra.mxu0 %v496
    %706 = vmatprep.subr.mxu0 0.0
    %707 = vmatpush1.msra.mxu0 %v497
    %708 = vmatprep.mubr.f32.mxu0 %v456
    %709 = vmatmul.mubr.f32.gmra.mrb[0].mxu0 %v455
    %v710 = vpop.f32.mrb[0].mxu0
    %v711 = vadd.f32 %v639, %v710
    %v712 = vpop.f32.mrb[0].mxu0
    %713 = vdwg.mxu0
    %714 = vmatprep.subr.mxu0 0.0
    %715 = vmatpush1.msra.mxu0 %v498
    %716 = vmatprep.subr.mxu0 0.0
    %717 = vmatpush1.msra.mxu0 %v499
    %718 = vmatprep.subr.mxu0 0.0
    %719 = vmatpush1.msra.mxu0 %v500
    %720 = vmatprep.subr.mxu0 0.0
    %721 = vmatpush1.msra.mxu0 %v501
    %722 = vmatprep.subr.mxu0 0.0
    %723 = vmatpush1.msra.mxu0 %v502
    %724 = vmatprep.subr.mxu0 0.0
    %725 = vmatpush1.msra.mxu0 %v503
    %726 = vmatprep.subr.mxu0 0.0
    %727 = vmatpush1.msra.mxu0 %v504
    %728 = vmatprep.subr.mxu0 0.0
    %729 = vmatpush1.msra.mxu0 %v505
    %730 = vmatprep.subr.mxu0 0.0
    %731 = vmatpush1.msra.mxu0 %v506
    %732 = vmatprep.subr.mxu0 0.0
    %733 = vmatpush1.msra.mxu0 %v507
    %734 = vmatprep.subr.mxu0 0.0
    %735 = vmatpush1.msra.mxu0 %v508
    %736 = vmatprep.subr.mxu0 0.0
    %737 = vmatpush1.msra.mxu0 %v509
    %738 = vmatprep.subr.mxu0 0.0
    %739 = vmatpush1.msra.mxu0 %v510
    %740 = vmatprep.subr.mxu0 0.0
    %741 = vmatpush1.msra.mxu0 %v511
    %742 = vmatprep.subr.mxu0 0.0
    %743 = vmatpush1.msra.mxu0 %v512
    %744 = vmatprep.subr.mxu0 0.0
    %745 = vmatpush1.msra.mxu0 %v513
    %746 = vmatprep.subr.mxu0 0.0
    %747 = vmatpush1.msra.mxu0 %v514
    %748 = vmatprep.subr.mxu0 0.0
    %749 = vmatpush1.msra.mxu0 %v515
    %750 = vmatprep.subr.mxu0 0.0
    %751 = vmatpush1.msra.mxu0 %v516
    %752 = vmatprep.subr.mxu0 0.0
    %753 = vmatpush1.msra.mxu0 %v517
    %754 = vmatprep.subr.mxu0 0.0
    %755 = vmatpush1.msra.mxu0 %v518
    %756 = vmatprep.subr.mxu0 0.0
    %757 = vmatpush1.msra.mxu0 %v519
    %758 = vmatprep.subr.mxu0 0.0
    %759 = vmatpush1.msra.mxu0 %v520
    %760 = vmatprep.subr.mxu0 0.0
    %761 = vmatpush1.msra.mxu0 %v521
    %762 = vmatprep.subr.mxu0 0.0
    %763 = vmatpush1.msra.mxu0 %v522
    %764 = vmatprep.subr.mxu0 0.0
    %765 = vmatpush1.msra.mxu0 %v523
    %766 = vmatprep.subr.mxu0 0.0
    %767 = vmatpush1.msra.mxu0 %v524
    %768 = vmatprep.subr.mxu0 0.0
    %769 = vmatpush1.msra.mxu0 %v525
    %770 = vmatprep.subr.mxu0 0.0
    %771 = vmatpush1.msra.mxu0 %v526
    %772 = vmatprep.subr.mxu0 0.0
    %773 = vmatpush1.msra.mxu0 %v527
    %774 = vmatprep.subr.mxu0 0.0
    %775 = vmatpush1.msra.mxu0 %v528
    %776 = vmatprep.subr.mxu0 0.0
    %777 = vmatpush1.msra.mxu0 %v529
    %778 = vmatprep.mubr.f32.mxu0 %v458
    %779 = vmatmul.mubr.f32.gmra.mrb[0].mxu0 %v457
    %v780 = vpop.f32.mrb[0].mxu0
    %v781 = vadd.f32 %v711, %v780
    %v782 = vpop.f32.mrb[0].mxu0
    %783 = vdwg.mxu0
    %784 = vmatprep.subr.mxu0 0.0
    %785 = vmatpush1.msra.mxu0 %v530
    %786 = vmatprep.subr.mxu0 0.0
    %787 = vmatpush1.msra.mxu0 %v531
    %788 = vmatprep.subr.mxu0 0.0
    %789 = vmatpush1.msra.mxu0 %v532
    %790 = vmatprep.subr.mxu0 0.0
    %791 = vmatpush1.msra.mxu0 %v533
    %792 = vmatprep.subr.mxu0 0.0
    %793 = vmatpush1.msra.mxu0 %v534
    %794 = vmatprep.subr.mxu0 0.0
    %795 = vmatpush1.msra.mxu0 %v535
    %796 = vmatprep.subr.mxu0 0.0
    %797 = vmatpush1.msra.mxu0 %v536
    %798 = vmatprep.subr.mxu0 0.0
    %799 = vmatpush1.msra.mxu0 %v537
    %800 = vmatprep.subr.mxu0 0.0
    %801 = vmatpush1.msra.mxu0 %v538
    %802 = vmatprep.subr.mxu0 0.0
    %803 = vmatpush1.msra.mxu0 %v539
    %804 = vmatprep.subr.mxu0 0.0
    %805 = vmatpush1.msra.mxu0 %v540
    %806 = vmatprep.subr.mxu0 0.0
    %807 = vmatpush1.msra.mxu0 %v541
    %808 = vmatprep.subr.mxu0 0.0
    %809 = vmatpush1.msra.mxu0 %v542
    %810 = vmatprep.subr.mxu0 0.0
    %811 = vmatpush1.msra.mxu0 %v543
    %812 = vmatprep.subr.mxu0 0.0
    %813 = vmatpush1.msra.mxu0 %v544
    %814 = vmatprep.subr.mxu0 0.0
    %815 = vmatpush1.msra.mxu0 %v545
    %816 = vmatprep.subr.mxu0 0.0
    %817 = vmatpush1.msra.mxu0 %v546
    %818 = vmatprep.subr.mxu0 0.0
    %819 = vmatpush1.msra.mxu0 %v547
    %820 = vmatprep.subr.mxu0 0.0
    %821 = vmatpush1.msra.mxu0 %v548
    %822 = vmatprep.subr.mxu0 0.0
    %823 = vmatpush1.msra.mxu0 %v549
    %824 = vmatprep.subr.mxu0 0.0
    %825 = vmatpush1.msra.mxu0 %v550
    %826 = vmatprep.subr.mxu0 0.0
    %827 = vmatpush1.msra.mxu0 %v551
    %828 = vmatprep.subr.mxu0 0.0
    %829 = vmatpush1.msra.mxu0 %v552
    %830 = vmatprep.subr.mxu0 0.0
    %831 = vmatpush1.msra.mxu0 %v553
    %832 = vmatprep.subr.mxu0 0.0
    %833 = vmatpush1.msra.mxu0 %v554
    %834 = vmatprep.subr.mxu0 0.0
    %835 = vmatpush1.msra.mxu0 %v555
    %836 = vmatprep.subr.mxu0 0.0
    %837 = vmatpush1.msra.mxu0 %v556
    %838 = vmatprep.subr.mxu0 0.0
    %839 = vmatpush1.msra.mxu0 %v557
    %840 = vmatprep.subr.mxu0 0.0
    %841 = vmatpush1.msra.mxu0 %v558
    %842 = vmatprep.subr.mxu0 0.0
    %843 = vmatpush1.msra.mxu0 %v559
    %844 = vmatprep.subr.mxu0 0.0
    %845 = vmatpush1.msra.mxu0 %v560
    %846 = vmatprep.subr.mxu0 0.0
    %847 = vmatpush1.msra.mxu0 %v561
    %848 = vmatprep.mubr.f32.mxu0 %v460
    %849 = vmatmul.mubr.f32.gmra.mrb[0].mxu0 %v459
    %v850 = vpop.f32.mrb[0].mxu0
    %v851 = vadd.f32 %v781, %v850
    %v852 = vpop.f32.mrb[0].mxu0
    %853 = vdwg.mxu0
    %854 = vmatprep.subr.mxu0 0.0
    %855 = vmatpush1.msra.mxu0 %v562
    %856 = vmatprep.subr.mxu0 0.0
    %857 = vmatpush1.msra.mxu0 %v563
    %858 = vmatprep.subr.mxu0 0.0
    %859 = vmatpush1.msra.mxu0 %v564
    %860 = vmatprep.subr.mxu0 0.0
    %861 = vmatpush1.msra.mxu0 %v565
    %862 = vmatprep.subr.mxu0 0.0
    %863 = vmatpush1.msra.mxu0 %v566
    %864 = vmatprep.subr.mxu0 0.0
    %865 = vmatpush1.msra.mxu0 %v567
    %866 = vmatprep.subr.mxu0 0.0
    %867 = vmatpush1.msra.mxu0 %v568
    %868 = vmatprep.subr.mxu0 0.0
    %869 = vmatpush1.msra.mxu0 %v569
    %870 = vmatprep.subr.mxu0 0.0
    %871 = vmatpush1.msra.mxu0 %v570
    %872 = vmatprep.subr.mxu0 0.0
    %873 = vmatpush1.msra.mxu0 %v571
    %874 = vmatprep.subr.mxu0 0.0
    %875 = vmatpush1.msra.mxu0 %v572
    %876 = vmatprep.subr.mxu0 0.0
    %877 = vmatpush1.msra.mxu0 %v573
    %878 = vmatprep.subr.mxu0 0.0
    %879 = vmatpush1.msra.mxu0 %v574
    %880 = vmatprep.subr.mxu0 0.0
    %881 = vmatpush1.msra.mxu0 %v575
    %882 = vmatprep.subr.mxu0 0.0
    %883 = vmatpush1.msra.mxu0 %v576
    %884 = vmatprep.subr.mxu0 0.0
    %885 = vmatpush1.msra.mxu0 %v577
    %886 = vmatprep.subr.mxu0 0.0
    %887 = vmatpush1.msra.mxu0 %v578
    %888 = vmatprep.subr.mxu0 0.0
    %889 = vmatpush1.msra.mxu0 %v579
    %890 = vmatprep.subr.mxu0 0.0
    %891 = vmatpush1.msra.mxu0 %v580
    %892 = vmatprep.subr.mxu0 0.0
    %893 = vmatpush1.msra.mxu0 %v581
    %894 = vmatprep.subr.mxu0 0.0
    %895 = vmatpush1.msra.mxu0 %v582
    %896 = vmatprep.subr.mxu0 0.0
    %897 = vmatpush1.msra.mxu0 %v583
    %898 = vmatprep.subr.mxu0 0.0
    %899 = vmatpush1.msra.mxu0 %v584
    %900 = vmatprep.subr.mxu0 0.0
    %901 = vmatpush1.msra.mxu0 %v585
    %902 = vmatprep.subr.mxu0 0.0
    %903 = vmatpush1.msra.mxu0 %v586
    %904 = vmatprep.subr.mxu0 0.0
    %905 = vmatpush1.msra.mxu0 %v587
    %906 = vmatprep.subr.mxu0 0.0
    %907 = vmatpush1.msra.mxu0 %v588
    %908 = vmatprep.subr.mxu0 0.0
    %909 = vmatpush1.msra.mxu0 %v589
    %910 = vmatprep.subr.mxu0 0.0
    %911 = vmatpush1.msra.mxu0 %v590
    %912 = vmatprep.subr.mxu0 0.0
    %913 = vmatpush1.msra.mxu0 %v591
    %914 = vmatprep.subr.mxu0 0.0
    %915 = vmatpush1.msra.mxu0 %v592
    %916 = vmatprep.subr.mxu0 0.0
    %917 = vmatpush1.msra.mxu0 %v593
    %918 = vmatprep.mubr.f32.mxu0 %v462
    %919 = vmatmul.mubr.f32.gmra.mrb[0].mxu0 %v461
    %v920 = vpop.f32.mrb[0].mxu0
    %v921 = vadd.f32 %v851, %v920
    %v922 = vpop.f32.mrb[0].mxu0
    %923 = vdwg.mxu0
    %924 = vmatprep.subr.mxu0 0.0
    %925 = vmatpush1.msra.mxu0 %v594
    %926 = vmatprep.subr.mxu0 0.0
    %927 = vmatpush1.msra.mxu0 %v595
    %928 = vmatprep.subr.mxu0 0.0
    %929 = vmatpush1.msra.mxu0 %v596
    %930 = vmatprep.subr.mxu0 0.0
    %931 = vmatpush1.msra.mxu0 %v597
    %932 = vmatprep.subr.mxu0 0.0
    %933 = vmatpush1.msra.mxu0 %v598
    %934 = vmatprep.subr.mxu0 0.0
    %935 = vmatpush1.msra.mxu0 %v599
    %936 = vmatprep.subr.mxu0 0.0
    %937 = vmatpush1.msra.mxu0 %v600
    %938 = vmatprep.subr.mxu0 0.0
    %939 = vmatpush1.msra.mxu0 %v601
    %940 = vmatprep.subr.mxu0 0.0
    %941 = vmatpush1.msra.mxu0 %v602
    %942 = vmatprep.subr.mxu0 0.0
    %943 = vmatpush1.msra.mxu0 %v603
    %944 = vmatprep.subr.mxu0 0.0
    %945 = vmatpush1.msra.mxu0 %v604
    %946 = vmatprep.subr.mxu0 0.0
    %947 = vmatpush1.msra.mxu0 %v605
    %948 = vmatprep.subr.mxu0 0.0
    %949 = vmatpush1.msra.mxu0 %v606
    %950 = vmatprep.subr.mxu0 0.0
    %951 = vmatpush1.msra.mxu0 %v607
    %952 = vmatprep.subr.mxu0 0.0
    %953 = vmatpush1.msra.mxu0 %v608
    %954 = vmatprep.subr.mxu0 0.0
    %955 = vmatpush1.msra.mxu0 %v609
    %956 = vmatprep.subr.mxu0 0.0
    %957 = vmatpush1.msra.mxu0 %v610
    %958 = vmatprep.subr.mxu0 0.0
    %959 = vmatpush1.msra.mxu0 %v611
    %960 = vmatprep.subr.mxu0 0.0
    %961 = vmatpush1.msra.mxu0 %v612
    %962 = vmatprep.subr.mxu0 0.0
    %963 = vmatpush1.msra.mxu0 %v613
    %964 = vmatprep.subr.mxu0 0.0
    %965 = vmatpush1.msra.mxu0 %v614
    %966 = vmatprep.subr.mxu0 0.0
    %967 = vmatpush1.msra.mxu0 %v615
    %968 = vmatprep.subr.mxu0 0.0
    %969 = vmatpush1.msra.mxu0 %v616
    %970 = vmatprep.subr.mxu0 0.0
    %971 = vmatpush1.msra.mxu0 %v617
    %972 = vmatprep.subr.mxu0 0.0
    %973 = vmatpush1.msra.mxu0 %v618
    %974 = vmatprep.subr.mxu0 0.0
    %975 = vmatpush1.msra.mxu0 %v619
    %976 = vmatprep.subr.mxu0 0.0
    %977 = vmatpush1.msra.mxu0 %v620
    %978 = vmatprep.subr.mxu0 0.0
    %979 = vmatpush1.msra.mxu0 %v621
    %980 = vmatprep.subr.mxu0 0.0
    %981 = vmatpush1.msra.mxu0 %v622
    %982 = vmatprep.subr.mxu0 0.0
    %983 = vmatpush1.msra.mxu0 %v623
    %984 = vmatprep.subr.mxu0 0.0
    %985 = vmatpush1.msra.mxu0 %v624
    %986 = vmatprep.subr.mxu0 0.0
    %987 = vmatpush1.msra.mxu0 %v625
    %988 = vmatprep.mubr.f32.mxu0 %v464
    %989 = vmatmul.mubr.f32.gmra.mrb[0].mxu0 %v463
    %v990 = vpop.f32.mrb[0].mxu0
    %v991 = vadd.f32 %v921, %v990
    %v992 = vpop.f32.mrb[0].mxu0
    %993 = vdwg.mxu0
    %994 = vmatprep.subr.mxu0 0.0
    %995 = vmatpush1.msra.mxu0 %v626
    %996 = vmatprep.subr.mxu0 0.0
    %997 = vmatpush1.msra.mxu0 %v627
    %998 = vmatprep.subr.mxu0 0.0
    %999 = vmatpush1.msra.mxu0 %v628
    %1000 = vmatprep.subr.mxu0 0.0
    %1001 = vmatpush1.msra.mxu0 %v629
    %1002 = vmatprep.subr.mxu0 0.0
    %1003 = vmatpush1.msra.mxu0 %v630
    %1004 = vmatprep.subr.mxu0 0.0
    %1005 = vmatpush1.msra.mxu0 %v631
    %1006 = vmatprep.subr.mxu0 0.0
    %1007 = vmatpush1.msra.mxu0 %v632
    %1008 = vmatprep.subr.mxu0 0.0
    %1009 = vmatpush1.msra.mxu0 %v633
    %1010 = vmatprep.subr.mxu0 0.0
    %1011 = vmatpush1.msra.mxu0 0.0
    %1012 = vmatprep.subr.mxu0 0.0
    %1013 = vmatpush1.msra.mxu0 0.0
    %1014 = vmatprep.subr.mxu0 0.0
    %1015 = vmatpush1.msra.mxu0 0.0
    %1016 = vmatprep.subr.mxu0 0.0
    %1017 = vmatpush1.msra.mxu0 0.0
    %1018 = vmatprep.subr.mxu0 0.0
    %1019 = vmatpush1.msra.mxu0 0.0
    %1020 = vmatprep.subr.mxu0 0.0
    %1021 = vmatpush1.msra.mxu0 0.0
    %1022 = vmatprep.subr.mxu0 0.0
    %1023 = vmatpush1.msra.mxu0 0.0
    %1024 = vmatprep.subr.mxu0 0.0
    %1025 = vmatpush1.msra.mxu0 0.0
    %1026 = vmatprep.subr.mxu0 0.0
    %1027 = vmatpush1.msra.mxu0 0.0
    %1028 = vmatprep.subr.mxu0 0.0
    %1029 = vmatpush1.msra.mxu0 0.0
    %1030 = vmatprep.subr.mxu0 0.0
    %1031 = vmatpush1.msra.mxu0 0.0
    %1032 = vmatprep.subr.mxu0 0.0
    %1033 = vmatpush1.msra.mxu0 0.0
    %1034 = vmatprep.subr.mxu0 0.0
    %1035 = vmatpush1.msra.mxu0 0.0
    %1036 = vmatprep.subr.mxu0 0.0
    %1037 = vmatpush1.msra.mxu0 0.0
    %1038 = vmatprep.subr.mxu0 0.0
    %1039 = vmatpush1.msra.mxu0 0.0
    %1040 = vmatprep.subr.mxu0 0.0
    %1041 = vmatpush1.msra.mxu0 0.0
    %1042 = vmatprep.subr.mxu0 0.0
    %1043 = vmatpush1.msra.mxu0 0.0
    %1044 = vmatprep.subr.mxu0 0.0
    %1045 = vmatpush1.msra.mxu0 0.0
    %1046 = vmatprep.subr.mxu0 0.0
    %1047 = vmatpush1.msra.mxu0 0.0
    %1048 = vmatprep.subr.mxu0 0.0
    %1049 = vmatpush1.msra.mxu0 0.0
    %1050 = vmatprep.subr.mxu0 0.0
    %1051 = vmatpush1.msra.mxu0 0.0
    %1052 = vmatprep.subr.mxu0 0.0
    %1053 = vmatpush1.msra.mxu0 0.0
    %1054 = vmatprep.subr.mxu0 0.0
    %1055 = vmatpush1.msra.mxu0 0.0
    %1056 = vmatprep.subr.mxu0 0.0
    %1057 = vmatpush1.msra.mxu0 0.0
    %1058 = vmatprep.mubr.f32.mxu0 0.0
    %1059 = vmatmul.mubr.f32.gmra.mrb[0].mxu0 %v642
    %v1060 = vpop.f32.mrb[0].mxu0
    %v1061 = vadd.f32 %v991, %v1060
    %v1062 = vpop.f32.mrb[0].mxu0
    %1063 = vdwg.mxu0
    %v1064 = vld [vmem:[%s5] sm:$0xff]
    %v1065 = vld [vmem:[%s5 + $0x8] sm:$0xff]
    %v1066 = vld [vmem:[%s5 + $0x10] sm:$0xff]
    %v1067 = vld [vmem:[%s5 + $0x18] sm:$0xff]
    %v1068 = vld [vmem:[%s6] sm:$0x1]
    %v1070 = vlaneseq
    %v1071 = vshrl.u32 %v1070, 7
    %v1072 = vsub.s32 0, %v1071
    %v1073 = vrot.slane %v1068, %v1072
    %vm1075 = vcmask 261120
    %v1077 = vsel %vm1075, %v1061, 0
    %1079 = vmatprep.subr.mxu0 0.0
    %1080 = vmatpush1.msra.mxu0 %v1064
    %1081 = vmatprep.subr.mxu0 0.0
    %1082 = vmatpush1.msra.mxu0 %v1065
    %1083 = vmatprep.subr.mxu0 0.0
    %1084 = vmatpush1.msra.mxu0 %v1066
    %1085 = vmatprep.subr.mxu0 0.0
    %1086 = vmatpush1.msra.mxu0 %v1067
    %1087 = vmatprep.subr.mxu0 0.0
    %1088 = vmatpush1.msra.mxu0 0.0
    %1089 = vmatprep.subr.mxu0 0.0
    %1090 = vmatpush1.msra.mxu0 0.0
    %1091 = vmatprep.subr.mxu0 0.0
    %1092 = vmatpush1.msra.mxu0 0.0
    %1093 = vmatprep.subr.mxu0 0.0
    %1094 = vmatpush1.msra.mxu0 0.0
    %1095 = vmatprep.subr.mxu0 0.0
    %1096 = vmatpush1.msra.mxu0 0.0
    %1097 = vmatprep.subr.mxu0 0.0
    %1098 = vmatpush1.msra.mxu0 0.0
    %1099 = vmatprep.subr.mxu0 0.0
    %1100 = vmatpush1.msra.mxu0 0.0
    %1101 = vmatprep.subr.mxu0 0.0
    %1102 = vmatpush1.msra.mxu0 0.0
    %1103 = vmatprep.subr.mxu0 0.0
    %1104 = vmatpush1.msra.mxu0 0.0
    %1105 = vmatprep.subr.mxu0 0.0
    %1106 = vmatpush1.msra.mxu0 0.0
    %1107 = vmatprep.subr.mxu0 0.0
    %1108 = vmatpush1.msra.mxu0 0.0
    %1109 = vmatprep.subr.mxu0 0.0
    %1110 = vmatpush1.msra.mxu0 0.0
    %1111 = vmatprep.subr.mxu0 0.0
    %1112 = vmatpush1.msra.mxu0 0.0
    %1113 = vmatprep.subr.mxu0 0.0
    %1114 = vmatpush1.msra.mxu0 0.0
    %1115 = vmatprep.subr.mxu0 0.0
    %1116 = vmatpush1.msra.mxu0 0.0
    %1117 = vmatprep.subr.mxu0 0.0
    %1118 = vmatpush1.msra.mxu0 0.0
    %1119 = vmatprep.subr.mxu0 0.0
    %1120 = vmatpush1.msra.mxu0 0.0
    %1121 = vmatprep.subr.mxu0 0.0
    %1122 = vmatpush1.msra.mxu0 0.0
    %1123 = vmatprep.subr.mxu0 0.0
    %1124 = vmatpush1.msra.mxu0 0.0
    %1125 = vmatprep.subr.mxu0 0.0
    %1126 = vmatpush1.msra.mxu0 0.0
    %1127 = vmatprep.subr.mxu0 0.0
    %1128 = vmatpush1.msra.mxu0 0.0
    %1129 = vmatprep.subr.mxu0 0.0
    %1130 = vmatpush1.msra.mxu0 0.0
    %1131 = vmatprep.subr.mxu0 0.0
    %1132 = vmatpush1.msra.mxu0 0.0
    %1133 = vmatprep.subr.mxu0 0.0
    %1134 = vmatpush1.msra.mxu0 0.0
    %1135 = vmatprep.subr.mxu0 0.0
    %1136 = vmatpush1.msra.mxu0 0.0
    %1137 = vmatprep.subr.mxu0 0.0
    %1138 = vmatpush1.msra.mxu0 0.0
    %1139 = vmatprep.subr.mxu0 0.0
    %1140 = vmatpush1.msra.mxu0 0.0
    %1141 = vmatprep.subr.mxu0 0.0
    %1142 = vmatpush1.msra.mxu0 0.0
    %1143 = vmatprep.mubr.f32.mxu0 0.0
    %1144 = vmatmul.mubr.f32.gmra.mrb[0].mxu0 %v1077
    %v1145 = vpop.f32.mrb[0].mxu0
    %v1146 = vadd.f32 %v1073, %v1145
    %v1147 = vpop.f32.mrb[0].mxu0
    %1148 = vdwg.mxu0
    %1149 = vst [vmem:[#allocation2] sm:$0xff] %v1146
    // Predicated region
    $region30: #{tpu_custom_call.1} parent=1 // pred_check
      _
    $region31: #{tpu_custom_call.1} parent=1 // pred_check_branch
      %1151 = sbr.rel (0) target = $region33
    $region32: #{tpu_custom_call.1} parent=1 // pred_region
      %s1153 = ssub.s32 128, 128
      %1154 = vsyncadd [#allocation3], %s1153
      %s1156 = sshll.u32 [#allocation2], 4
      %s1157 = int_to_ptr.vmem [resolvable:$true] %s1156
      %1159 = dma.vmem_to_hbm [thread:$0]  %s1157, 128, %s7, [#allocation3]
    $region33: #{tpu_custom_call.1} parent=1 // pred_fallthru
      _
    // Predicated region
    $region34: #{tpu_custom_call.1} parent=1 // pred_check
      _
    $region35: #{tpu_custom_call.1} parent=1 // pred_check_branch
      %1161 = sbr.rel (0) target = $region37
    $region36: #{tpu_custom_call.1} parent=1 // pred_region
      %1162 = dma.done [#allocation3], 128
    $region37: #{tpu_custom_call.1} parent=1 // pred_fallthru
      _
    %1163 = vsyncpa [#allocation3], 1

</llo_original>
